<compile_context>
chip_gen: v5e
topology: v5e:2x2
jax: 0.10.0
libtpu: 0.0.40
codegen_flags: <defaults>
</compile_context>

<pallas_src>
import functools
import math

import jax
import jax.numpy as jnp
from jax.experimental import pallas as pl
from jax.experimental.pallas import tpu as pltpu

# ----------------------- config (mirrors the PyTorch module) -----------------------
VOCAB = 21128              # embed_num / num_classes / BertConfig.vocab_size
HIDDEN = 512               # hidden_size / embed_size
NUM_LAYERS = 6
NUM_HEADS = 8
HEAD_DIM = HIDDEN // NUM_HEADS
INTERMEDIATE = 3072        # BertConfig default intermediate_size
MAX_POS = 512
TYPE_VOCAB = 2
LN_EPS = 1e-12
EMBED_SIZE = HIDDEN
MAX_LEN = 8750             # CNNClass: pool kernel = MAX_LEN + 1 - k  => global max
KERNEL_SIZES = (2, 3, 4, 5)
NUM_FILTERS = EMBED_SIZE // 4                  # 128
NUM_CONV_OUT = NUM_FILTERS * len(KERNEL_SIZES)  # 512
MAX_K = max(KERNEL_SIZES)                      # 5

MASK_VALUE = -10000.0      # HF BERT additive mask value

VOCAB_TILE = 1024          # tn for the two (512, 21128) matmuls
T_TILE = 256               # conv length tile
HALO = 16                  # conv halo rows (>= MAX_K - 1, bf16 sublane aligned)


def round_up(x, m):
    return (x + m - 1) // m * m


VOCAB_PAD = round_up(VOCAB, VOCAB_TILE)        # 21504

_SQRT2 = math.sqrt(2.0)


def _act_identity(x):
    return x


def _act_gelu(x):  # exact erf-gelu, as in HF BERT
    return 0.5 * x * (1.0 + jax.lax.erf(x / _SQRT2))


_ACTS = {None: _act_identity, "gelu": _act_gelu}


# ======================= Pallas kernel 1: tiled matmul (+bias, +act) ================
def _matmul_kernel(a_ref, b_ref, bias_ref, o_ref, acc_ref, *, act):
    k = pl.program_id(2)

    @pl.when(k == 0)
    def _init():
        acc_ref[...] = jnp.zeros_like(acc_ref)

    acc_ref[...] += jnp.dot(a_ref[...], b_ref[...],
                            preferred_element_type=jnp.float32)

    @pl.when(k == pl.num_programs(2) - 1)
    def _fin():
        r = acc_ref[...] + bias_ref[...]          # (tm, tn) + (1, tn)
        o_ref[...] = act(r).astype(o_ref.dtype)


def pallas_linear(x, w, b=None, act=None, tm=None, tk=512, tn=512, n_out=None):
    """y = act(x @ w + b); x: (..., K), w: (K, N) (bf16, may be pre-padded on N)."""
    *lead, K = x.shape
    K2, N = w.shape
    assert K == K2, (K, K2)
    if n_out is None:
        n_out = N
    x2 = x.reshape(-1, K)
    M = x2.shape[0]
    if tm is None:
        tm = min(128, round_up(M, 8))             # adaptive: M is 2..24 here
    tk = min(tk, round_up(K, 128))
    tn = min(tn, round_up(N, 128))
    Mp, Kp, Np = round_up(M, tm), round_up(K, tk), round_up(N, tn)

    a = x2.astype(jnp.bfloat16)                   # bf16 MXU operands, f32 accum
    if (Mp, Kp) != (M, K):
        a = jnp.pad(a, ((0, Mp - M), (0, Kp - K)))
    wp = w.astype(jnp.bfloat16)
    if (Kp, Np) != (K, N):
        wp = jnp.pad(wp, ((0, Kp - K), (0, Np - N)))
    if b is None:
        bp = jnp.zeros((1, Np), jnp.float32)
    else:
        bp = b.astype(jnp.float32).reshape(1, -1)
        if bp.shape[1] != Np:
            bp = jnp.pad(bp, ((0, 0), (0, Np - bp.shape[1])))

    out = pl.pallas_call(
        functools.partial(_matmul_kernel, act=_ACTS[act]),
        out_shape=jax.ShapeDtypeStruct((Mp, Np), jnp.float32),
        grid=(Mp // tm, Np // tn, Kp // tk),
        in_specs=[
            pl.BlockSpec((tm, tk), lambda i, j, k: (i, k)),
            pl.BlockSpec((tk, tn), lambda i, j, k: (k, j)),
            pl.BlockSpec((1, tn), lambda i, j, k: (0, j)),
        ],
        out_specs=pl.BlockSpec((tm, tn), lambda i, j, k: (i, j)),
        scratch_shapes=[pltpu.VMEM((tm, tn), jnp.float32)],
        compiler_params=pltpu.CompilerParams(
            dimension_semantics=("parallel", "parallel", "arbitrary")),
    )(a, wp, bp)
    return out[:M, :n_out].reshape(*lead, n_out)


# ======================= Pallas kernel 2: (residual +) LayerNorm ====================
def _ln_body(x, g_ref, b_ref, o_ref, eps):
    mu = jnp.mean(x, axis=-1, keepdims=True)
    xc = x - mu
    var = jnp.mean(xc * xc, axis=-1, keepdims=True)
    o_ref[...] = (xc * jax.lax.rsqrt(var + eps) * g_ref[...] + b_ref[...]
                  ).astype(o_ref.dtype)


def _ln_kernel(x_ref, g_ref, b_ref, o_ref, *, eps):
    _ln_body(x_ref[...], g_ref, b_ref, o_ref, eps)


def _add_ln_kernel(x_ref, r_ref, g_ref, b_ref, o_ref, *, eps):
    _ln_body(x_ref[...] + r_ref[...], g_ref, b_ref, o_ref, eps)


def pallas_layernorm(x, g, b, residual=None, eps=LN_EPS):
    """LayerNorm(x [+ residual]) over the last dim, one grid step (M <= 128)."""
    shp = x.shape
    H = shp[-1]
    x2 = x.reshape(-1, H).astype(jnp.float32)
    M = x2.shape[0]
    Mp = round_up(M, 8)
    if Mp != M:
        x2 = jnp.pad(x2, ((0, Mp - M), (0, 0)))
    row_spec = pl.BlockSpec((Mp, H), lambda i: (0, 0))
    vec_spec = pl.BlockSpec((1, H), lambda i: (0, 0))
    if residual is None:
        kern = functools.partial(_ln_kernel, eps=eps)
        args = (x2, g.reshape(1, H), b.reshape(1, H))
        in_specs = [row_spec, vec_spec, vec_spec]
    else:
        r2 = residual.reshape(-1, H).astype(jnp.float32)
        if Mp != M:
            r2 = jnp.pad(r2, ((0, Mp - M), (0, 0)))
        kern = functools.partial(_add_ln_kernel, eps=eps)
        args = (x2, r2, g.reshape(1, H), b.reshape(1, H))
        in_specs = [row_spec, row_spec, vec_spec, vec_spec]
    out = pl.pallas_call(
        kern,
        out_shape=jax.ShapeDtypeStruct((Mp, H), jnp.float32),
        grid=(1,),
        in_specs=in_specs,
        out_specs=row_spec,
    )(*args)
    return out[:M].reshape(shp)


# ======================= Pallas kernel 3: fused multi-head attention ================
def _mha_kernel(q_ref, k_ref, v_ref, bias_ref, o_ref, *, scale):
    q = q_ref[0]                      # (NH, Sq, Dh)
    k = k_ref[0]                      # (NH, Sk, Dh)
    v = v_ref[0]                      # (NH, Sk, Dh)
    s = jnp.einsum("hqd,hkd->hqk", q, k, preferred_element_type=jnp.float32)
    s = s * scale + bias_ref[0][None, :, :]
    s = s - jnp.max(s, axis=-1, keepdims=True)
    p = jnp.exp(s)
    p = p / jnp.sum(p, axis=-1, keepdims=True)
    o_ref[0] = jnp.einsum("hqk,hkd->hqd", p, v,
                          preferred_element_type=jnp.float32).astype(o_ref.dtype)


def pallas_mha(q, k, v, bias):
    """q/k/v: (B, NH, S, Dh); bias: (B, Sq, Sk) additive mask. All heads per step."""
    B, NH, Sq, Dh = q.shape
    Sk = k.shape[2]
    Sq_p, Sk_p = round_up(Sq, 8), round_up(Sk, 8)
    if Sq_p != Sq:
        q = jnp.pad(q, ((0, 0), (0, 0), (0, Sq_p - Sq), (0, 0)))
    if Sk_p != Sk:
        k = jnp.pad(k, ((0, 0), (0, 0), (0, Sk_p - Sk), (0, 0)))
        v = jnp.pad(v, ((0, 0), (0, 0), (0, Sk_p - Sk), (0, 0)))
    if (Sq_p, Sk_p) != (Sq, Sk):
        bias = jnp.pad(bias, ((0, 0), (0, Sq_p - Sq), (0, Sk_p - Sk)),
                       constant_values=-1e9)
    out = pl.pallas_call(
        functools.partial(_mha_kernel, scale=1.0 / math.sqrt(Dh)),
        out_shape=jax.ShapeDtypeStruct((B, NH, Sq_p, Dh), jnp.float32),
        grid=(B,),
        in_specs=[
            pl.BlockSpec((1, NH, Sq_p, Dh), lambda b: (b, 0, 0, 0)),
            pl.BlockSpec((1, NH, Sk_p, Dh), lambda b: (b, 0, 0, 0)),
            pl.BlockSpec((1, NH, Sk_p, Dh), lambda b: (b, 0, 0, 0)),
            pl.BlockSpec((1, Sq_p, Sk_p), lambda b: (b, 0, 0)),
        ],
        out_specs=pl.BlockSpec((1, NH, Sq_p, Dh), lambda b: (b, 0, 0, 0)),
        compiler_params=pltpu.CompilerParams(dimension_semantics=("parallel",)),
    )(q.astype(jnp.float32), k.astype(jnp.float32), v.astype(jnp.float32),
      bias.astype(jnp.float32))
    return out[:, :, :Sq, :]


# ====== Pallas kernel 4: fused full-width Conv2d (k=2..5) + global max-pool =========
def _conv_max_kernel(x_ref, h_ref, w_ref, o_ref, acc_ref, *, seq_len):
    t = pl.program_id(1)

    @pl.when(t == 0)
    def _init():
        acc_ref[...] = jnp.full(acc_ref.shape, -1e30, dtype=acc_ref.dtype)

    # main tile + halo rows from the next tile -> in-VMEM shifted matmuls.
    full = jnp.concatenate([x_ref[0], h_ref[0]], axis=0)      # (T+HALO, E) bf16
    conv = jnp.dot(full[0:T_TILE], w_ref[0],
                   preferred_element_type=jnp.float32)        # (T, 4C) f32
    for j in range(1, MAX_K):
        conv += jnp.dot(full[j:j + T_TILE], w_ref[j],
                        preferred_element_type=jnp.float32)

    # mask positions past the valid conv length of each kernel-size block:
    # column block kk (128 wide) is kernel size k = 2 + kk, valid pos < L + 1 - k.
    pos = t * T_TILE + jax.lax.broadcasted_iota(jnp.int32, conv.shape, 0)
    ksz = 2 + jax.lax.broadcasted_iota(jnp.int32, conv.shape, 1) // NUM_FILTERS
    conv = jnp.where(pos < seq_len + 1 - ksz, conv, -1e30)

    m = jnp.max(conv, axis=0, keepdims=True)                  # (1, 4C)
    acc_ref[...] = jnp.maximum(acc_ref[...], jnp.broadcast_to(m, acc_ref.shape))

    @pl.when(t == pl.num_programs(1) - 1)
    def _fin():
        o_ref[0] = acc_ref[...]


def pallas_conv_maxpool(emb, w, seq_len):
    """emb: (B, Lp+HALO, E) bf16; w: (MAX_K, E, 4C) bf16 (rows j>=k zeroed per block).
    Returns (B, 4C) f32: global max over valid positions of all 4 convolutions."""
    B, Ltot, E = emb.shape
    Lp = Ltot - HALO
    C4 = w.shape[-1]
    out = pl.pallas_call(
        functools.partial(_conv_max_kernel, seq_len=seq_len),
        out_shape=jax.ShapeDtypeStruct((B, 8, C4), jnp.float32),
        grid=(B, Lp // T_TILE),
        in_specs=[
            pl.BlockSpec((1, T_TILE, E), lambda b, t: (b, t, 0)),
            # halo: next 16 rows of the SAME array, via a second BlockSpec
            pl.BlockSpec((1, HALO, E),
                         lambda b, t: (b, (t + 1) * (T_TILE // HALO), 0)),
            pl.BlockSpec((MAX_K, E, C4), lambda b, t: (0, 0, 0)),
        ],
        out_specs=pl.BlockSpec((1, 8, C4), lambda b, t: (b, 0, 0)),
        scratch_shapes=[pltpu.VMEM((8, C4), jnp.float32)],
        compiler_params=pltpu.CompilerParams(
            dimension_semantics=("parallel", "arbitrary")),
    )(emb, emb, w)
    return out[:, 0, :]


# ======================= BERT building blocks (orchestration) =======================
def _split_heads(x):
    B, S, _ = x.shape
    return x.reshape(B, S, NUM_HEADS, HEAD_DIM).transpose(0, 2, 1, 3)


def _merge_heads(x):
    B, NH, S, Dh = x.shape
    return x.transpose(0, 2, 1, 3).reshape(B, S, NH * Dh)


def self_attention_block(p, h, bias):
    qkv = pallas_linear(h, p["self_qkv_w"], p["self_qkv_b"])          # fused QKV
    q, k, v = jnp.split(qkv, 3, axis=-1)
    ctx = _merge_heads(pallas_mha(_split_heads(q), _split_heads(k),
                                  _split_heads(v), bias))
    out = pallas_linear(ctx, p["self_o_w"], p["self_o_b"])
    return pallas_layernorm(out, p["self_ln_g"], p["self_ln_b"], residual=h)


def cross_attention_block(p, h, enc_h, bias):
    q = pallas_linear(h, p["cross_q_w"], p["cross_q_b"])
    kv = pallas_linear(enc_h, p["cross_kv_w"], p["cross_kv_b"])       # fused KV
    k, v = jnp.split(kv, 2, axis=-1)
    ctx = _merge_heads(pallas_mha(_split_heads(q), _split_heads(k),
                                  _split_heads(v), bias))
    out = pallas_linear(ctx, p["cross_o_w"], p["cross_o_b"])
    return pallas_layernorm(out, p["cross_ln_g"], p["cross_ln_b"], residual=h)


def encoder_layer(p, h, self_bias):
    a = self_attention_block(p, h, self_bias)
    inter = pallas_linear(a, p["inter_w"], p["inter_b"], act="gelu")
    out = pallas_linear(inter, p["out_w"], p["out_b"])
    return pallas_layernorm(out, p["out_ln_g"], p["out_ln_b"], residual=a)


def decoder_layer(p, h, self_bias, enc_h, cross_bias):
    a = self_attention_block(p, h, self_bias)
    c = cross_attention_block(p, a, enc_h, cross_bias)
    inter = pallas_linear(c, p["inter_w"], p["inter_b"], act="gelu")
    out = pallas_linear(inter, p["out_w"], p["out_b"])
    return pallas_layernorm(out, p["out_ln_g"], p["out_ln_b"], residual=c)


def bert_embeddings(emb_p, ids):
    # TODO(synk): embedding-table gathers stay in plain JAX (irregular gather).
    S = ids.shape[1]
    x = (emb_p["word_emb"][ids]
         + emb_p["pos_emb"][:S][None, :, :]
         + emb_p["type_emb"][0][None, None, :])
    return pallas_layernorm(x, emb_p["ln_g"], emb_p["ln_b"])


def cnn_forward(p, knowledge_ids):
    B, L = knowledge_ids.shape
    Lp = round_up(L, T_TILE)
    ids = jnp.pad(knowledge_ids, ((0, 0), (0, Lp + HALO - L)))   # pad with token 0
    emb = p["word_embedding"][ids]                               # (B, Lp+HALO, E) bf16
    pooled = pallas_conv_maxpool(emb, p["conv_w"], L)            # (B, 4C)
    feature = pooled + p["conv_b"][None, :]        # bias commutes with global max
    return pallas_linear(feature, p["transfer_w"], p["transfer_b"],
                         tn=VOCAB_TILE, n_out=VOCAB)             # (B, VOCAB)


# ----------------------------- jitted stages -----------------------------
@jax.jit
def _encoder_prep(emb_p, ids, mask):
    B, S = ids.shape
    h = bert_embeddings(emb_p, ids)
    m = mask.astype(jnp.float32)
    bias = (1.0 - jnp.broadcast_to(m[:, None, :], (B, S, S))) * MASK_VALUE
    return h, bias


@jax.jit
def _decoder_prep(emb_p, ids, mask):
    B, S = ids.shape
    h = bert_embeddings(emb_p, ids)
    m = mask.astype(jnp.float32)
    causal = jnp.tril(jnp.ones((S, S), jnp.float32))
    bias = (1.0 - causal[None, :, :] * m[:, None, :]) * MASK_VALUE
    return h, bias


_encoder_layer_jit = jax.jit(encoder_layer)
_decoder_layer_jit = jax.jit(decoder_layer)


@jax.jit
def _head_and_knowledge(lm_w, cnn_p, dec_h, knowledge_ids):
    logits = pallas_linear(dec_h, lm_w, None, tn=VOCAB_TILE, n_out=VOCAB)
    kb = cnn_forward(cnn_p, knowledge_ids)                       # (B, VOCAB)
    # torch: kb.expand(S, B, V).permute(1, 0, 2)  ==  broadcast over seq dim
    return logits + kb[:, None, :]


def model_forward(params, input_ids, mask_encoder_input, output_ids,
                  mask_decoder_input, knowledge_input):
    # ---------------- encoder ----------------
    enc_h, enc_bias = _encoder_prep(params["encoder"]["emb"], input_ids,
                                    mask_encoder_input)
    for lp in params["encoder"]["layers"]:
        enc_h = _encoder_layer_jit(lp, enc_h, enc_bias)

    # ---------------- decoder (causal self-attn + cross-attn) ----------------
    dec_h, dec_bias = _decoder_prep(params["decoder"]["emb"], output_ids,
                                    mask_decoder_input)
    B, S_dec = output_ids.shape
    cross_bias = jnp.zeros((B, S_dec, input_ids.shape[1]), jnp.float32)
    for lp in params["decoder"]["layers"]:
        dec_h = _decoder_layer_jit(lp, dec_h, dec_bias, enc_h, cross_bias)

    # ---------------- LM head + knowledge bias ----------------
    return _head_and_knowledge(params["lm_w"], params["cnn"], dec_h,
                               knowledge_input)


# ======================= deterministic parameter init ===============================
class _KeyGen:
    def __init__(self, key):
        self._key = key

    def __call__(self):
        self._key, sub = jax.random.split(self._key)
        return sub


def _normal(key, shape, std=0.02):
    return jax.random.normal(key, shape, jnp.float32) * std


def init_bert_params(kg, is_decoder):
    emb = {
        "word_emb": _normal(kg(), (VOCAB, HIDDEN)),
        "pos_emb": _normal(kg(), (MAX_POS, HIDDEN)),
        "type_emb": _normal(kg(), (TYPE_VOCAB, HIDDEN)),
        "ln_g": jnp.ones((HIDDEN,), jnp.float32),
        "ln_b": jnp.zeros((HIDDEN,), jnp.float32),
    }
    layers = []
    for _ in range(NUM_LAYERS):
        lp = {
            "self_qkv_w": _normal(kg(), (HIDDEN, 3 * HIDDEN)).astype(jnp.bfloat16),
            "self_qkv_b": jnp.zeros((3 * HIDDEN,), jnp.float32),
            "self_o_w": _normal(kg(), (HIDDEN, HIDDEN)).astype(jnp.bfloat16),
            "self_o_b": jnp.zeros((HIDDEN,), jnp.float32),
            "self_ln_g": jnp.ones((HIDDEN,), jnp.float32),
            "self_ln_b": jnp.zeros((HIDDEN,), jnp.float32),
        }
        if is_decoder:
            lp.update({
                "cross_q_w": _normal(kg(), (HIDDEN, HIDDEN)).astype(jnp.bfloat16),
                "cross_q_b": jnp.zeros((HIDDEN,), jnp.float32),
                "cross_kv_w": _normal(kg(), (HIDDEN, 2 * HIDDEN)).astype(jnp.bfloat16),
                "cross_kv_b": jnp.zeros((2 * HIDDEN,), jnp.float32),
                "cross_o_w": _normal(kg(), (HIDDEN, HIDDEN)).astype(jnp.bfloat16),
                "cross_o_b": jnp.zeros((HIDDEN,), jnp.float32),
                "cross_ln_g": jnp.ones((HIDDEN,), jnp.float32),
                "cross_ln_b": jnp.zeros((HIDDEN,), jnp.float32),
            })
        lp.update({
            "inter_w": _normal(kg(), (HIDDEN, INTERMEDIATE)).astype(jnp.bfloat16),
            "inter_b": jnp.zeros((INTERMEDIATE,), jnp.float32),
            "out_w": _normal(kg(), (INTERMEDIATE, HIDDEN)).astype(jnp.bfloat16),
            "out_b": jnp.zeros((HIDDEN,), jnp.float32),
            "out_ln_g": jnp.ones((HIDDEN,), jnp.float32),
            "out_ln_b": jnp.zeros((HIDDEN,), jnp.float32),
        })
        layers.append(lp)
    return {"emb": emb, "layers": layers}


def init_cnn_params(kg):
    # torch Conv2d weight (C_out, 1, k, E) stored fused as (MAX_K, E, 4*C):
    # column block kk holds kernel size k = KERNEL_SIZES[kk]; rows j >= k are zero.
    w = jnp.zeros((MAX_K, EMBED_SIZE, NUM_CONV_OUT), jnp.float32)
    for kk, ks in enumerate(KERNEL_SIZES):
        wk = _normal(kg(), (ks, EMBED_SIZE, NUM_FILTERS))
        w = w.at[:ks, :, kk * NUM_FILTERS:(kk + 1) * NUM_FILTERS].set(wk)
    return {
        "word_embedding": _normal(kg(), (VOCAB, EMBED_SIZE)).astype(jnp.bfloat16),
        "conv_w": w.astype(jnp.bfloat16),
        "conv_b": jnp.zeros((NUM_CONV_OUT,), jnp.float32),
        # pre-padded to the VOCAB tile so no per-call pad of the 21 MB weight
        "transfer_w": jnp.pad(_normal(kg(), (EMBED_SIZE, VOCAB)),
                              ((0, 0), (0, VOCAB_PAD - VOCAB))).astype(jnp.bfloat16),
        "transfer_b": jnp.zeros((VOCAB_PAD,), jnp.float32),
    }


def init_params(key):
    kg = _KeyGen(key)
    return {
        "encoder": init_bert_params(kg, is_decoder=False),
        "decoder": init_bert_params(kg, is_decoder=True),
        # Linear(512, 21128, bias=False), pre-padded along N to the tile
        "lm_w": jnp.pad(_normal(kg(), (HIDDEN, VOCAB)),
                        ((0, 0), (0, VOCAB_PAD - VOCAB))).astype(jnp.bfloat16),
        "cnn": init_cnn_params(kg),
    }


# ======================= demo ========================================================
if __name__ == "__main__":
    root = jax.random.PRNGKey(0)
    k_params, k_inputs = jax.random.split(root)

    params = init_params(k_params)

    B, S_ENC, S_DEC = 2, 8, 10
    ks = jax.random.split(k_inputs, 3)
    input_ids = jax.random.randint(ks[0], (B, S_ENC), 0, VOCAB, dtype=jnp.int32)
    output_ids = jax.random.randint(ks[1], (B, S_DEC), 0, VOCAB, dtype=jnp.int32)
    knowledge_input = jax.random.randint(ks[2], (B, MAX_LEN), 0, VOCAB, dtype=jnp.int32)
    mask_encoder_input = jnp.ones((B, S_ENC), jnp.int32).at[1, -2:].set(0)
    mask_decoder_input = jnp.ones((B, S_DEC), jnp.int32).at[1, -3:].set(0)

    out = model_forward(params, input_ids, mask_encoder_input, output_ids,
                        mask_decoder_input, knowledge_input)
    out = jax.block_until_ready(out)
    assert out.shape == (B, S_DEC, VOCAB) and out.dtype == jnp.float32
    print("KERNEL_OK")
</pallas_src>

<mosaic_0001>
module attributes {stable_mosaic.version = 11 : i64} {
  func.func @_ln_kernel(%arg0: i32, %arg1: memref<16x512xf32, #tpu.memory_space<vmem>>, %arg2: memref<1x512xf32, #tpu.memory_space<vmem>>, %arg3: memref<1x512xf32, #tpu.memory_space<vmem>>, %arg4: memref<16x512xf32, #tpu.memory_space<vmem>>) attributes {dimension_semantics = [#tpu.dimension_semantics<arbitrary>], iteration_bounds = array<i64: 1>, scalar_prefetch = 0 : i64, scratch_operands = 0 : i64, tpu.core_type = #tpu.core_type<tc>, window_params = [{pipeline_mode = #tpu.pipeline_mode<synchronous>, transform_indices = @transform_0, window_bounds = array<i64: 16, 512>}, {pipeline_mode = #tpu.pipeline_mode<synchronous>, transform_indices = @transform_1, window_bounds = array<i64: 1, 512>}, {pipeline_mode = #tpu.pipeline_mode<synchronous>, transform_indices = @transform_2, window_bounds = array<i64: 1, 512>}, {pipeline_mode = #tpu.pipeline_mode<synchronous>, transform_indices = @transform_3, window_bounds = array<i64: 16, 512>}]} {
    %c0 = arith.constant 0 : index
    %c0_0 = arith.constant 0 : index
    %0 = vector.load %arg1[%c0, %c0_0] : memref<16x512xf32, #tpu.memory_space<vmem>>, vector<16x512xf32>
    %cst = arith.constant dense<0.000000e+00> : vector<16xf32>
    %1 = vector.multi_reduction <add>, %0, %cst [1] : vector<16x512xf32> to vector<16xf32>
    %2 = vector.shape_cast %1 : vector<16xf32> to vector<16x1xf32>
    %cst_1 = arith.constant 5.120000e+02 : f32
    %3 = vector.broadcast %cst_1 : f32 to vector<16x1xf32>
    %4 = arith.divf %2, %3 : vector<16x1xf32>
    %5 = vector.broadcast %4 : vector<16x1xf32> to vector<16x512xf32>
    %6 = arith.subf %0, %5 : vector<16x512xf32>
    %7 = arith.mulf %6, %6 : vector<16x512xf32>
    %cst_2 = arith.constant dense<0.000000e+00> : vector<16xf32>
    %8 = vector.multi_reduction <add>, %7, %cst_2 [1] : vector<16x512xf32> to vector<16xf32>
    %9 = vector.shape_cast %8 : vector<16xf32> to vector<16x1xf32>
    %cst_3 = arith.constant 5.120000e+02 : f32
    %10 = vector.broadcast %cst_3 : f32 to vector<16x1xf32>
    %11 = arith.divf %9, %10 : vector<16x1xf32>
    %cst_4 = arith.constant 9.99999996E-13 : f32
    %12 = vector.broadcast %cst_4 : f32 to vector<16x1xf32>
    %13 = arith.addf %11, %12 : vector<16x1xf32>
    %14 = math.rsqrt %13 : vector<16x1xf32>
    %15 = vector.broadcast %14 : vector<16x1xf32> to vector<16x512xf32>
    %16 = arith.mulf %6, %15 : vector<16x512xf32>
    %c0_5 = arith.constant 0 : index
    %c0_6 = arith.constant 0 : index
    %17 = vector.load %arg2[%c0_5, %c0_6] : memref<1x512xf32, #tpu.memory_space<vmem>>, vector<1x512xf32>
    %18 = vector.broadcast %17 : vector<1x512xf32> to vector<16x512xf32>
    %19 = arith.mulf %16, %18 : vector<16x512xf32>
    %c0_7 = arith.constant 0 : index
    %c0_8 = arith.constant 0 : index
    %20 = vector.load %arg3[%c0_7, %c0_8] : memref<1x512xf32, #tpu.memory_space<vmem>>, vector<1x512xf32>
    %21 = vector.broadcast %20 : vector<1x512xf32> to vector<16x512xf32>
    %22 = arith.addf %19, %21 : vector<16x512xf32>
    %c0_9 = arith.constant 0 : index
    %c0_10 = arith.constant 0 : index
    %23 = vector.load %arg4[%c0_9, %c0_10] : memref<16x512xf32, #tpu.memory_space<vmem>>, vector<16x512xf32>
    tpu.vector_store %arg4[%c0_9, %c0_10], %22 {strides = array<i32>} : memref<16x512xf32, #tpu.memory_space<vmem>>, vector<16x512xf32>,
    return
  }
  func.func @transform_0(%arg0: i32) -> (i32, i32) {
    %c0_i32 = arith.constant 0 : i32
    %c0_i32_0 = arith.constant 0 : i32
    %c0_i32_1 = arith.constant 0 : i32
    return %c0_i32, %c0_i32_0 : i32, i32
  }
  func.func @transform_1(%arg0: i32) -> (i32, i32) {
    %c0_i32 = arith.constant 0 : i32
    %c0_i32_0 = arith.constant 0 : i32
    %c0_i32_1 = arith.constant 0 : i32
    return %c0_i32, %c0_i32_0 : i32, i32
  }
  func.func @transform_2(%arg0: i32) -> (i32, i32) {
    %c0_i32 = arith.constant 0 : i32
    %c0_i32_0 = arith.constant 0 : i32
    %c0_i32_1 = arith.constant 0 : i32
    return %c0_i32, %c0_i32_0 : i32, i32
  }
  func.func @transform_3(%arg0: i32) -> (i32, i32) {
    %c0_i32 = arith.constant 0 : i32
    %c0_i32_0 = arith.constant 0 : i32
    %c0_i32_1 = arith.constant 0 : i32
    return %c0_i32, %c0_i32_0 : i32, i32
  }
}

</mosaic_0001>

<llo_original>
// kernel: _encoder_prep.1
$region0: #{_encoder_prep.1}
  #allocation0 [shape = 'u32[]', space=smem, size = 0x4, offset = 0x4, fixed_abs, tag = 'smem constant byte address 0x4 - core index']
  #allocation1 [shape = 'u32[72,128]{1,0:T(1,128)}', space=vmem, size = 0x9000, scoped, tag = 'internal scratch']
  %s0 = inlined_call_operand.vmem [shape: f32[16,512], index: 0, kind: input, shape index: {}]
  %s1 = inlined_call_operand.hbm [shape: f32[1,512], index: 1, kind: input, shape index: {}]
  %s2 = inlined_call_operand.hbm [shape: f32[1,512], index: 2, kind: input, shape index: {}]
  %s3 = inlined_call_operand.hbm [shape: f32[16,512], index: 3, kind: output, shape index: {}]
  %s4 = sld [smem:[#allocation0]]
  $region30: #{_encoder_prep.1} parent=0
    _
  %s6 = ssub.s32 1, %s4
  %s7 = scalar_select 0, %s6, %s4
  $region1: #{_encoder_prep.1} parent=0
    #allocation2 [shape = 'u8[2048]{0}', space=vmem, size = 0x800, scoped, tag = 'input window, operand 1, single buffered']
    #allocation3 [shape = 's32[1]{0}', space=sflag, size = 0x4, scoped, tag = 'scoped memory for _encoder_prep.1']
    #allocation4 [shape = 's32[1]{0}', space=sflag, size = 0x4, scoped, tag = 'scoped memory for _encoder_prep.1']
    #allocation5 [shape = 'u8[2048]{0}', space=vmem, size = 0x800, scoped, tag = 'input window, operand 2, single buffered']
    #allocation6 [shape = 's32[1]{0}', space=sflag, size = 0x4, scoped, tag = 'scoped memory for _encoder_prep.1']
    #allocation7 [shape = 'u8[32768]{0}', space=vmem, size = 0x8000, scoped, tag = 'output window, operand 0, single buffered']
    %8 = vsyncpa [#allocation3], 0
    %9 = vsyncpa [#allocation6], 0
    %10 = vsyncpa [#allocation4], 0
    // Predicated region
    $region2: #{_encoder_prep.1} parent=1 // pred_check
      _
    $region3: #{_encoder_prep.1} parent=1 // pred_check_branch
      %12 = sbr.rel (0) target = $region5
    $region4: #{_encoder_prep.1} parent=1 // pred_region
      _
    $region5: #{_encoder_prep.1} parent=1 // pred_fallthru
      _
    // Predicated region
    $region6: #{_encoder_prep.1} parent=1 // pred_check
      _
    $region7: #{_encoder_prep.1} parent=1 // pred_check_branch
      %14 = sbr.rel (0) target = $region9
    $region8: #{_encoder_prep.1} parent=1 // pred_region
      %16 = vsyncadd [#allocation3], 0
      %s18 = sshll.u32 %s1, 4
      %s19 = int_to_ptr.hbm [resolvable:$true] %s18
      %s20 = sshll.u32 [#allocation2], 4
      %s21 = int_to_ptr.vmem [resolvable:$true] %s20
      %23 = dma.hbm_to_vmem [thread:$0]  %s19, 64, %s21, [#allocation3]
    $region9: #{_encoder_prep.1} parent=1 // pred_fallthru
      _
    // Predicated region
    $region10: #{_encoder_prep.1} parent=1 // pred_check
      _
    $region11: #{_encoder_prep.1} parent=1 // pred_check_branch
      %25 = sbr.rel (0) target = $region13
    $region12: #{_encoder_prep.1} parent=1 // pred_region
      %27 = vsyncadd [#allocation6], 0
      %s29 = sshll.u32 %s2, 4
      %s30 = int_to_ptr.hbm [resolvable:$true] %s29
      %s31 = sshll.u32 [#allocation5], 4
      %s32 = int_to_ptr.vmem [resolvable:$true] %s31
      %34 = dma.hbm_to_vmem [thread:$0]  %s30, 64, %s32, [#allocation6]
    $region13: #{_encoder_prep.1} parent=1 // pred_fallthru
      _
    // Predicated region
    $region14: #{_encoder_prep.1} parent=1 // pred_check
      _
    $region15: #{_encoder_prep.1} parent=1 // pred_check_branch
      %36 = sbr.rel (0) target = $region17
    $region16: #{_encoder_prep.1} parent=1 // pred_region
      %38 = dma.done [#allocation3], 64
    $region17: #{_encoder_prep.1} parent=1 // pred_fallthru
      _
    // Predicated region
    $region18: #{_encoder_prep.1} parent=1 // pred_check
      _
    $region19: #{_encoder_prep.1} parent=1 // pred_check_branch
      %40 = sbr.rel (0) target = $region21
    $region20: #{_encoder_prep.1} parent=1 // pred_region
      %42 = dma.done [#allocation6], 64
    $region21: #{_encoder_prep.1} parent=1 // pred_fallthru
      _
    %v43 = vld [vmem:[%s0] sm:$0xff]
    %v44 = vld [vmem:[%s0 + $0x8] sm:$0xff]
    %v45 = vld [vmem:[%s0 + $0x10] sm:$0xff]
    %v46 = vld [vmem:[%s0 + $0x18] sm:$0xff]
    %v47 = vld [vmem:[%s0 + $0x20] sm:$0xff]
    %v48 = vld [vmem:[%s0 + $0x28] sm:$0xff]
    %v49 = vld [vmem:[%s0 + $0x30] sm:$0xff]
    %v50 = vld [vmem:[%s0 + $0x38] sm:$0xff]
    %v51 = vadd.f32 %v43, %v44
    %v52 = vadd.f32 %v51, %v45
    %v53 = vadd.f32 %v52, %v46
    %54 = vadd.xlane.f32.xlu0 %v53
    %v55 = vpop.xlane.xlu0 %54
    %v56 = vadd.f32 %v47, %v48
    %v57 = vadd.f32 %v56, %v49
    %v58 = vadd.f32 %v57, %v50
    %59 = vadd.xlane.f32.xlu0 %v58
    %v60 = vpop.xlane.xlu0 %59
    %v61 = vrcp.pop 512.0
    %v62 = vmul.f32 512.0, %v61
    %v63 = vsub.f32 1.0, %v62
    %v64 = vmul.f32 %v61, %v63
    %v65 = vadd.f32 %v61, %v64
    %vm66 = vweird.f32 %v61
    %v67 = vsel %vm66, %v61, %v65
    %v68 = vmul.f32 %v55, %v67
    %v69 = vmul.f32 %v60, %v67
    %v70 = vsub.f32 %v43, %v68
    %v71 = vsub.f32 %v44, %v68
    %v72 = vsub.f32 %v45, %v68
    %v73 = vsub.f32 %v46, %v68
    %v74 = vsub.f32 %v47, %v69
    %v75 = vsub.f32 %v48, %v69
    %v76 = vsub.f32 %v49, %v69
    %v77 = vsub.f32 %v50, %v69
    %v78 = vmul.f32 %v70, %v70
    %v79 = vmul.f32 %v71, %v71
    %v80 = vmul.f32 %v72, %v72
    %v81 = vmul.f32 %v73, %v73
    %v82 = vmul.f32 %v74, %v74
    %v83 = vmul.f32 %v75, %v75
    %v84 = vmul.f32 %v76, %v76
    %v85 = vmul.f32 %v77, %v77
    %v86 = vadd.f32 %v78, %v79
    %v87 = vadd.f32 %v86, %v80
    %v88 = vadd.f32 %v87, %v81
    %89 = vadd.xlane.f32.xlu0 %v88
    %v90 = vpop.xlane.xlu0 %89
    %v91 = vadd.f32 %v82, %v83
    %v92 = vadd.f32 %v91, %v84
    %v93 = vadd.f32 %v92, %v85
    %94 = vadd.xlane.f32.xlu0 %v93
    %v95 = vpop.xlane.xlu0 %94
    %v96 = vmul.f32 %v90, %v67
    %v97 = vmul.f32 %v95, %v67
    %v98 = vadd.f32 %v96, 1e-12
    %v99 = vadd.f32 %v97, 1e-12
    %v100 = vrsqrt.pop %v98
    %v101 = vmul.f32 %v100, %v98
    %v102 = vmul.f32 %v101, %v100
    %v103 = vmul.f32 0.5, %v102
    %v104 = vsub.f32 1.5, %v103
    %v105 = vmul.f32 %v100, %v104
    %vm106 = vweird.f32 %v98
    %vm107 = vweird.f32 %v100
    %vm108 = vmor %vm106, %vm107
    %v109 = vsel %vm108, %v100, %v105
    %v110 = vrsqrt.pop %v99
    %v111 = vmul.f32 %v110, %v99
    %v112 = vmul.f32 %v111, %v110
    %v113 = vmul.f32 0.5, %v112
    %v114 = vsub.f32 1.5, %v113
    %v115 = vmul.f32 %v110, %v114
    %vm116 = vweird.f32 %v99
    %vm117 = vweird.f32 %v110
    %vm118 = vmor %vm116, %vm117
    %v119 = vsel %vm118, %v110, %v115
    %v120 = vmul.f32 %v70, %v109
    %v121 = vmul.f32 %v71, %v109
    %v122 = vmul.f32 %v72, %v109
    %v123 = vmul.f32 %v73, %v109
    %v124 = vmul.f32 %v74, %v119
    %v125 = vmul.f32 %v75, %v119
    %v126 = vmul.f32 %v76, %v119
    %v127 = vmul.f32 %v77, %v119
    %v128 = vld [vmem:[#allocation2] sm:$0xf]
    %v130 = vperm.slane %v128, 0
    %v131 = vperm.slane %v128, 1
    %v132 = vperm.slane %v128, 2
    %v133 = vperm.slane %v128, 3
    %v138 = vmul.f32 %v120, %v130
    %v139 = vmul.f32 %v121, %v131
    %v140 = vmul.f32 %v122, %v132
    %v141 = vmul.f32 %v123, %v133
    %v142 = vmul.f32 %v124, %v130
    %v143 = vmul.f32 %v125, %v131
    %v144 = vmul.f32 %v126, %v132
    %v145 = vmul.f32 %v127, %v133
    %v146 = vld [vmem:[#allocation5] sm:$0xf]
    %v148 = vperm.slane %v146, 0
    %v149 = vperm.slane %v146, 1
    %v150 = vperm.slane %v146, 2
    %v151 = vperm.slane %v146, 3
    %v156 = vadd.f32 %v138, %v148
    %v157 = vadd.f32 %v139, %v149
    %v158 = vadd.f32 %v140, %v150
    %v159 = vadd.f32 %v141, %v151
    %v160 = vadd.f32 %v142, %v148
    %v161 = vadd.f32 %v143, %v149
    %v162 = vadd.f32 %v144, %v150
    %v163 = vadd.f32 %v145, %v151
    %164 = vst [vmem:[#allocation7] sm:$0xff] %v156
    %165 = vst [vmem:[#allocation7 + $0x8] sm:$0xff] %v157
    %166 = vst [vmem:[#allocation7 + $0x10] sm:$0xff] %v158
    %167 = vst [vmem:[#allocation7 + $0x18] sm:$0xff] %v159
    %168 = vst [vmem:[#allocation7 + $0x20] sm:$0xff] %v160
    %169 = vst [vmem:[#allocation7 + $0x28] sm:$0xff] %v161
    %170 = vst [vmem:[#allocation7 + $0x30] sm:$0xff] %v162
    %171 = vst [vmem:[#allocation7 + $0x38] sm:$0xff] %v163
    // Predicated region
    $region22: #{_encoder_prep.1} parent=1 // pred_check
      _
    $region23: #{_encoder_prep.1} parent=1 // pred_check_branch
      %173 = sbr.rel (0) target = $region25
    $region24: #{_encoder_prep.1} parent=1 // pred_region
      %175 = vsyncadd [#allocation4], 0
      %s176 = sshll.u32 [#allocation7], 4
      %s177 = int_to_ptr.vmem [resolvable:$true] %s176
      %s178 = sshll.u32 %s3, 4
      %s179 = int_to_ptr.hbm [resolvable:$true] %s178
      %184 = dma.vmem_to_hbm [thread:$0]  %s177, 1024, %s179, [#allocation4], 512, 512, 32
    $region25: #{_encoder_prep.1} parent=1 // pred_fallthru
      _
    // Predicated region
    $region26: #{_encoder_prep.1} parent=1 // pred_check
      _
    $region27: #{_encoder_prep.1} parent=1 // pred_check_branch
      %186 = sbr.rel (0) target = $region29
    $region28: #{_encoder_prep.1} parent=1 // pred_region
      %188 = dma.done [#allocation4], 1024
    $region29: #{_encoder_prep.1} parent=1 // pred_fallthru
      _
    %189 = vsyncpa [#allocation3], 1
    %190 = vsyncpa [#allocation6], 1
    %191 = vsyncpa [#allocation4], 1

</llo_original>
